<compile_context>
chip_gen: v7x
topology: tpu7x:2x2x1
jax: 0.10.0
libtpu: 0.0.40
codegen_flags: <defaults>
</compile_context>

<pallas_src>
import jax
import jax.numpy as jnp
from jax.experimental import pallas as pl
from jax.experimental.pallas import tpu as pltpu


def _round_up(n: int, m: int) -> int:
    return (n + m - 1) // m * m


def damn_kernel(x_ref, wb_ref, bb_ref, wa_ref, whf_ref, bhf_ref,
                wp_ref, preds_ref, logit_ref):
    # --- backbone: feature = x @ Wb + bb  (f32 accumulation) --------------
    feature = jnp.dot(x_ref[...], wb_ref[...],
                      preferred_element_type=jnp.float32)
    feature = feature + bb_ref[...]                       # (TB, F) + (1, F)
    feat_c = feature.astype(wa_ref.dtype)                 # bf16 path for MXU

    # --- attention: logits = feature @ Wa ; softmax over domains ----------
    logits = jnp.dot(feat_c, wa_ref[...],
                     preferred_element_type=jnp.float32)  # (TB, D)
    logit_ref[...] = logits
    m = jnp.max(logits, axis=-1, keepdims=True)
    e = jnp.exp(logits - m)
    # approx reciprocal lowers to the otherwise-idle EUP slot.
    attn = e * pl.reciprocal(jnp.sum(e, axis=-1, keepdims=True), approx=True)

    # --- fused per-domain heads: one (TB, F) @ (F, D*O) matmul ------------
    preds_flat = jnp.dot(feat_c, whf_ref[...],
                         preferred_element_type=jnp.float32)
    preds_flat = preds_flat + bhf_ref[...]                # (TB, D*O) + (1, D*O)
    preds_ref[...] = preds_flat                           # lane-dense slab store

    # --- attention-weighted mixture (D is tiny; static unroll on VPU) -----
    D = logit_ref.shape[-1]
    O = wp_ref.shape[-1]
    weighted = attn[:, 0:1] * preds_flat[:, 0:O]
    for d in range(1, D):
        weighted = weighted + attn[:, d:d + 1] * preds_flat[:, d * O:(d + 1) * O]
    wp_ref[...] = weighted


def damn_forward(x, wb, bb, wa, wh, bh, *, block_b=128,
                 compute_dtype=jnp.float32):
    """Returns (weighted_prediction, predictions, attention_logit)."""
    B, in_dim = x.shape
    F, D = wa.shape
    O = wh.shape[2]
    DO = D * O

    # Fuse the D head weight matrices: wh_fused[f, d*O + o] = wh[d, f, o].
    wh_fused = jnp.transpose(wh, (1, 0, 2)).reshape(F, DO)
    bh_flat = bh.reshape(1, DO)

    # Batch tile (multiple of 8 sublanes); pad B so the grid divides evenly.
    tb = min(block_b, _round_up(B, 8))
    Bp = _round_up(B, tb)
    if Bp != B:
        x = jnp.pad(x, ((0, Bp - B), (0, 0)))

    # Optional bf16 MXU inputs (v6e/v7x); accumulation stays f32 in-kernel.
    xc = x.astype(compute_dtype)
    wbc = wb.astype(compute_dtype)
    wac = wa.astype(compute_dtype)
    whc = wh_fused.astype(compute_dtype)

    grid = (Bp // tb,)
    itm = jnp.dtype(compute_dtype).itemsize
    cost = pl.CostEstimate(
        flops=2 * B * F * (in_dim + D + DO) + 8 * B * D + 2 * B * DO,
        transcendentals=B * D,
        bytes_accessed=itm * (Bp * in_dim + in_dim * F + F * D + F * DO)
        + 4 * (F + DO + Bp * (O + DO + D)),
    )

    out_shapes = (
        jax.ShapeDtypeStruct((Bp, O), jnp.float32),    # weighted_prediction
        jax.ShapeDtypeStruct((Bp, DO), jnp.float32),   # predictions (flat, lane-dense)
        jax.ShapeDtypeStruct((Bp, D), jnp.float32),    # attention_logit
    )

    wp, preds_flat, logits = pl.pallas_call(
        damn_kernel,
        out_shape=out_shapes,
        grid=grid,
        in_specs=[
            pl.BlockSpec((tb, in_dim), lambda i: (i, 0)),   # x: tiled over batch
            pl.BlockSpec((in_dim, F), lambda i: (0, 0)),    # Wb: VMEM-resident
            pl.BlockSpec((1, F), lambda i: (0, 0)),         # bb
            pl.BlockSpec((F, D), lambda i: (0, 0)),         # Wa
            pl.BlockSpec((F, DO), lambda i: (0, 0)),        # fused head weights
            pl.BlockSpec((1, DO), lambda i: (0, 0)),        # fused head biases
        ],
        out_specs=(
            pl.BlockSpec((tb, O), lambda i: (i, 0)),
            pl.BlockSpec((tb, DO), lambda i: (i, 0)),
            pl.BlockSpec((tb, D), lambda i: (i, 0)),
        ),
        compiler_params=pltpu.CompilerParams(
            dimension_semantics=("parallel",),
            vmem_limit_bytes=32 * 1024 * 1024,
        ),
        cost_estimate=cost,
    )(xc, wbc, bb, wac, whc, bh_flat)

    weighted = wp[:B]
    predictions = preds_flat[:B].reshape(B, D, O)
    attention_logit = logits[:B]
    return weighted, predictions, attention_logit


def reference_forward(x, wb, bb, wa, wh, bh):
    feature = x @ wb + bb
    logits = feature @ wa
    attn = jax.nn.softmax(logits, axis=1)
    preds = jnp.stack([feature @ wh[d] + bh[d, 0] for d in range(wh.shape[0])], axis=1)
    weighted = jnp.sum(attn[:, :, None] * preds, axis=1)
    return weighted, preds, logits


if __name__ == "__main__":
    B, IN_DIM, FEATURE_DIM, DOMAIN_NUM, OUT_DIM = 8, 32, 32, 4, 8

    key = jax.random.PRNGKey(0)
    kx, kwb, kbb, kwa, kwh, kbh = jax.random.split(key, 6)

    x = jax.random.normal(kx, (B, IN_DIM), dtype=jnp.float32)
    # backbone Linear(in_dim -> feature_dim)
    wb = jax.random.uniform(kwb, (IN_DIM, FEATURE_DIM), minval=-0.1, maxval=0.1)
    bb = jax.random.uniform(kbb, (1, FEATURE_DIM), minval=-0.1, maxval=0.1)
    # attention W ~ U(-0.1, 0.1), shape (feature_dim, domain_num)
    wa = jax.random.uniform(kwa, (FEATURE_DIM, DOMAIN_NUM), minval=-0.1, maxval=0.1)
    # domain heads: Linear(feature_dim -> out_dim), one per domain
    wh = jax.random.uniform(kwh, (DOMAIN_NUM, FEATURE_DIM, OUT_DIM), minval=-0.1, maxval=0.1)
    bh = jax.random.uniform(kbh, (DOMAIN_NUM, 1, OUT_DIM), minval=-0.1, maxval=0.1)

    weighted, preds, logits = jax.block_until_ready(
        damn_forward(x, wb, bb, wa, wh, bh))

    # correctness check against pure-JAX reference
    ref_w, ref_p, ref_l = reference_forward(x, wb, bb, wa, wh, bh)
    assert jnp.allclose(logits, ref_l, atol=1e-5), "logits mismatch"
    assert jnp.allclose(preds, ref_p, atol=1e-5), "predictions mismatch"
    # weighted goes through the approx (EUP) reciprocal in the softmax -> ~1e-3 rel.
    assert jnp.allclose(weighted, ref_w, atol=5e-3), "weighted mismatch"

    print("KERNEL_OK")
</pallas_src>

<mosaic_0001>
module attributes {stable_mosaic.version = 11 : i64} {
  func.func @damn_kernel(%arg0: i32, %arg1: memref<8x32xf32, #tpu.memory_space<vmem>>, %arg2: memref<32x32xf32, #tpu.memory_space<vmem>>, %arg3: memref<1x32xf32, #tpu.memory_space<vmem>>, %arg4: memref<32x4xf32, #tpu.memory_space<vmem>>, %arg5: memref<32x32xf32, #tpu.memory_space<vmem>>, %arg6: memref<1x32xf32, #tpu.memory_space<vmem>>, %arg7: memref<8x8xf32, #tpu.memory_space<vmem>>, %arg8: memref<8x32xf32, #tpu.memory_space<vmem>>, %arg9: memref<8x4xf32, #tpu.memory_space<vmem>>) attributes {dimension_semantics = [#tpu.dimension_semantics<parallel>], iteration_bounds = array<i64: 1>, scalar_prefetch = 0 : i64, scratch_operands = 0 : i64, tpu.core_type = #tpu.core_type<tc>, window_params = [{transform_indices = @transform_0, window_bounds = array<i64: 8, 32>}, {pipeline_mode = #tpu.pipeline_mode<synchronous>, transform_indices = @transform_1, window_bounds = array<i64: 32, 32>}, {pipeline_mode = #tpu.pipeline_mode<synchronous>, transform_indices = @transform_2, window_bounds = array<i64: 1, 32>}, {pipeline_mode = #tpu.pipeline_mode<synchronous>, transform_indices = @transform_3, window_bounds = array<i64: 32, 4>}, {pipeline_mode = #tpu.pipeline_mode<synchronous>, transform_indices = @transform_4, window_bounds = array<i64: 32, 32>}, {pipeline_mode = #tpu.pipeline_mode<synchronous>, transform_indices = @transform_5, window_bounds = array<i64: 1, 32>}, {transform_indices = @transform_6, window_bounds = array<i64: 8, 8>}, {transform_indices = @transform_7, window_bounds = array<i64: 8, 32>}, {transform_indices = @transform_8, window_bounds = array<i64: 8, 4>}]} {
    %c0 = arith.constant 0 : index
    %c0_0 = arith.constant 0 : index
    %0 = vector.load %arg1[%c0, %c0_0] : memref<8x32xf32, #tpu.memory_space<vmem>>, vector<8x32xf32>
    %c0_1 = arith.constant 0 : index
    %c0_2 = arith.constant 0 : index
    %1 = vector.load %arg2[%c0_1, %c0_2] : memref<32x32xf32, #tpu.memory_space<vmem>>, vector<32x32xf32>
    %cst = arith.constant dense<0.000000e+00> : vector<8x32xf32>
    %2 = tpu.matmul %0, %1, %cst {dimension_numbers = #tpu.dot_dimension_numbers<[1], [0], [0], [1], [0, 0, 1, 1], [], []>} : vector<8x32xf32>, vector<32x32xf32>, vector<8x32xf32> -> vector<8x32xf32>
    %c0_3 = arith.constant 0 : index
    %c0_4 = arith.constant 0 : index
    %3 = vector.load %arg3[%c0_3, %c0_4] : memref<1x32xf32, #tpu.memory_space<vmem>>, vector<1x32xf32>
    %4 = vector.broadcast %3 : vector<1x32xf32> to vector<8x32xf32>
    %5 = arith.addf %2, %4 : vector<8x32xf32>
    %c0_5 = arith.constant 0 : index
    %c0_6 = arith.constant 0 : index
    %6 = vector.load %arg4[%c0_5, %c0_6] : memref<32x4xf32, #tpu.memory_space<vmem>>, vector<32x4xf32>
    %cst_7 = arith.constant dense<0.000000e+00> : vector<8x4xf32>
    %7 = tpu.matmul %5, %6, %cst_7 {dimension_numbers = #tpu.dot_dimension_numbers<[1], [0], [0], [1], [0, 0, 1, 1], [], []>} : vector<8x32xf32>, vector<32x4xf32>, vector<8x4xf32> -> vector<8x4xf32>
    %c0_8 = arith.constant 0 : index
    %c0_9 = arith.constant 0 : index
    %8 = vector.load %arg9[%c0_8, %c0_9] : memref<8x4xf32, #tpu.memory_space<vmem>>, vector<8x4xf32>
    tpu.vector_store %arg9[%c0_8, %c0_9], %7 {strides = array<i32>} : memref<8x4xf32, #tpu.memory_space<vmem>>, vector<8x4xf32>,
    %cst_10 = arith.constant dense<0xFF800000> : vector<8xf32>
    %9 = vector.multi_reduction <maximumf>, %7, %cst_10 [1] : vector<8x4xf32> to vector<8xf32>
    %10 = vector.shape_cast %9 : vector<8xf32> to vector<8x1xf32>
    %11 = vector.broadcast %10 : vector<8x1xf32> to vector<8x4xf32>
    %12 = arith.subf %7, %11 : vector<8x4xf32>
    %13 = math.exp %12 : vector<8x4xf32>
    %cst_11 = arith.constant dense<0.000000e+00> : vector<8xf32>
    %14 = vector.multi_reduction <add>, %13, %cst_11 [1] : vector<8x4xf32> to vector<8xf32>
    %15 = vector.shape_cast %14 : vector<8xf32> to vector<8x1xf32>
    %16 = tpu.reciprocal %15 {approx = true} : vector<8x1xf32> -> vector<8x1xf32>
    %17 = vector.broadcast %16 : vector<8x1xf32> to vector<8x4xf32>
    %18 = arith.mulf %13, %17 : vector<8x4xf32>
    %c0_12 = arith.constant 0 : index
    %c0_13 = arith.constant 0 : index
    %19 = vector.load %arg5[%c0_12, %c0_13] : memref<32x32xf32, #tpu.memory_space<vmem>>, vector<32x32xf32>
    %cst_14 = arith.constant dense<0.000000e+00> : vector<8x32xf32>
    %20 = tpu.matmul %5, %19, %cst_14 {dimension_numbers = #tpu.dot_dimension_numbers<[1], [0], [0], [1], [0, 0, 1, 1], [], []>} : vector<8x32xf32>, vector<32x32xf32>, vector<8x32xf32> -> vector<8x32xf32>
    %c0_15 = arith.constant 0 : index
    %c0_16 = arith.constant 0 : index
    %21 = vector.load %arg6[%c0_15, %c0_16] : memref<1x32xf32, #tpu.memory_space<vmem>>, vector<1x32xf32>
    %22 = vector.broadcast %21 : vector<1x32xf32> to vector<8x32xf32>
    %23 = arith.addf %20, %22 : vector<8x32xf32>
    %c0_17 = arith.constant 0 : index
    %c0_18 = arith.constant 0 : index
    %24 = vector.load %arg8[%c0_17, %c0_18] : memref<8x32xf32, #tpu.memory_space<vmem>>, vector<8x32xf32>
    tpu.vector_store %arg8[%c0_17, %c0_18], %23 {strides = array<i32>} : memref<8x32xf32, #tpu.memory_space<vmem>>, vector<8x32xf32>,
    %25 = vector.extract_strided_slice %18 {offsets = [0, 0], sizes = [8, 1], strides = [1, 1]} : vector<8x4xf32> to vector<8x1xf32>
    %26 = vector.extract_strided_slice %23 {offsets = [0, 0], sizes = [8, 8], strides = [1, 1]} : vector<8x32xf32> to vector<8x8xf32>
    %27 = vector.broadcast %25 : vector<8x1xf32> to vector<8x8xf32>
    %28 = arith.mulf %27, %26 : vector<8x8xf32>
    %29 = vector.extract_strided_slice %18 {offsets = [0, 1], sizes = [8, 1], strides = [1, 1]} : vector<8x4xf32> to vector<8x1xf32>
    %30 = vector.extract_strided_slice %23 {offsets = [0, 8], sizes = [8, 8], strides = [1, 1]} : vector<8x32xf32> to vector<8x8xf32>
    %31 = vector.broadcast %29 : vector<8x1xf32> to vector<8x8xf32>
    %32 = arith.mulf %31, %30 : vector<8x8xf32>
    %33 = arith.addf %28, %32 : vector<8x8xf32>
    %34 = vector.extract_strided_slice %18 {offsets = [0, 2], sizes = [8, 1], strides = [1, 1]} : vector<8x4xf32> to vector<8x1xf32>
    %35 = vector.extract_strided_slice %23 {offsets = [0, 16], sizes = [8, 8], strides = [1, 1]} : vector<8x32xf32> to vector<8x8xf32>
    %36 = vector.broadcast %34 : vector<8x1xf32> to vector<8x8xf32>
    %37 = arith.mulf %36, %35 : vector<8x8xf32>
    %38 = arith.addf %33, %37 : vector<8x8xf32>
    %39 = vector.extract_strided_slice %18 {offsets = [0, 3], sizes = [8, 1], strides = [1, 1]} : vector<8x4xf32> to vector<8x1xf32>
    %40 = vector.extract_strided_slice %23 {offsets = [0, 24], sizes = [8, 8], strides = [1, 1]} : vector<8x32xf32> to vector<8x8xf32>
    %41 = vector.broadcast %39 : vector<8x1xf32> to vector<8x8xf32>
    %42 = arith.mulf %41, %40 : vector<8x8xf32>
    %43 = arith.addf %38, %42 : vector<8x8xf32>
    %c0_19 = arith.constant 0 : index
    %c0_20 = arith.constant 0 : index
    %44 = vector.load %arg7[%c0_19, %c0_20] : memref<8x8xf32, #tpu.memory_space<vmem>>, vector<8x8xf32>
    tpu.vector_store %arg7[%c0_19, %c0_20], %43 {strides = array<i32>} : memref<8x8xf32, #tpu.memory_space<vmem>>, vector<8x8xf32>,
    return
  }
  func.func @transform_0(%arg0: i32) -> (i32, i32) {
    %c0_i32 = arith.constant 0 : i32
    %c0_i32_0 = arith.constant 0 : i32
    return %arg0, %c0_i32 : i32, i32
  }
  func.func @transform_1(%arg0: i32) -> (i32, i32) {
    %c0_i32 = arith.constant 0 : i32
    %c0_i32_0 = arith.constant 0 : i32
    %c0_i32_1 = arith.constant 0 : i32
    return %c0_i32, %c0_i32_0 : i32, i32
  }
  func.func @transform_2(%arg0: i32) -> (i32, i32) {
    %c0_i32 = arith.constant 0 : i32
    %c0_i32_0 = arith.constant 0 : i32
    %c0_i32_1 = arith.constant 0 : i32
    return %c0_i32, %c0_i32_0 : i32, i32
  }
  func.func @transform_3(%arg0: i32) -> (i32, i32) {
    %c0_i32 = arith.constant 0 : i32
    %c0_i32_0 = arith.constant 0 : i32
    %c0_i32_1 = arith.constant 0 : i32
    return %c0_i32, %c0_i32_0 : i32, i32
  }
  func.func @transform_4(%arg0: i32) -> (i32, i32) {
    %c0_i32 = arith.constant 0 : i32
    %c0_i32_0 = arith.constant 0 : i32
    %c0_i32_1 = arith.constant 0 : i32
    return %c0_i32, %c0_i32_0 : i32, i32
  }
  func.func @transform_5(%arg0: i32) -> (i32, i32) {
    %c0_i32 = arith.constant 0 : i32
    %c0_i32_0 = arith.constant 0 : i32
    %c0_i32_1 = arith.constant 0 : i32
    return %c0_i32, %c0_i32_0 : i32, i32
  }
  func.func @transform_6(%arg0: i32) -> (i32, i32) {
    %c0_i32 = arith.constant 0 : i32
    %c0_i32_0 = arith.constant 0 : i32
    return %arg0, %c0_i32 : i32, i32
  }
  func.func @transform_7(%arg0: i32) -> (i32, i32) {
    %c0_i32 = arith.constant 0 : i32
    %c0_i32_0 = arith.constant 0 : i32
    return %arg0, %c0_i32 : i32, i32
  }
  func.func @transform_8(%arg0: i32) -> (i32, i32) {
    %c0_i32 = arith.constant 0 : i32
    %c0_i32_0 = arith.constant 0 : i32
    return %arg0, %c0_i32 : i32, i32
  }
}

</mosaic_0001>

<llo_original>
// kernel: tpu_custom_call.1
$region0: #{tpu_custom_call.1}
  #allocation0 [shape = 'u32[]', space=smem, size = 0x4, offset = 0x4, fixed_abs, tag = 'smem constant byte address 0x4 - core index']
  #allocation1 [shape = 'u32[144,128]{1,0:T(1,128)}', space=vmem, size = 0x12000, scoped, tag = 'internal scratch']
  %s0 = inlined_call_operand.hbm [shape: f32[8,32], index: 0, kind: input, shape index: {}]
  %s1 = inlined_call_operand.vmem [shape: f32[32,32], index: 1, kind: input, shape index: {}]
  %s2 = inlined_call_operand.vmem [shape: f32[1,32], index: 2, kind: input, shape index: {}]
  %s3 = inlined_call_operand.vmem [shape: f32[32,4], index: 3, kind: input, shape index: {}]
  %s4 = inlined_call_operand.hbm [shape: f32[32,32], index: 4, kind: input, shape index: {}]
  %s5 = inlined_call_operand.vmem [shape: f32[1,32], index: 5, kind: input, shape index: {}]
  %s6 = inlined_call_operand.hbm [shape: f32[8,8], index: 6, kind: output, shape index: {0}]
  %s7 = inlined_call_operand.hbm [shape: f32[8,32], index: 7, kind: output, shape index: {1}]
  %s8 = inlined_call_operand.vmem [shape: f32[8,4], index: 8, kind: output, shape index: {2}]
  %9 = xla_tuple %s6, %s7, %s8
  %s10 = sld [smem:[#allocation0]]
  $region58: #{tpu_custom_call.1} parent=0
    _
  %s12 = ssub.s32 1, %s10
  %s13 = scalar_select 0, %s12, %s10
  $region1: #{tpu_custom_call.1} parent=0
    #allocation2 [shape = 'u8[4096]{0}', space=vmem, size = 0x1000, scoped, tag = 'input window, operand 0, single buffered']
    #allocation3 [shape = 's32[1]{0}', space=sflag, size = 0x4, scoped, tag = 'scoped memory for tpu_custom_call.1']
    #allocation4 [shape = 's32[1]{0}', space=sflag, size = 0x4, scoped, tag = 'scoped memory for tpu_custom_call.1']
    #allocation5 [shape = 'u8[16384]{0}', space=vmem, size = 0x4000, scoped, tag = 'input window, operand 4, single buffered']
    #allocation6 [shape = 's32[1]{0}', space=sflag, size = 0x4, scoped, tag = 'scoped memory for tpu_custom_call.1']
    #allocation7 [shape = 'u8[4096]{0}', space=vmem, size = 0x1000, scoped, tag = 'output window, operand 0, single buffered']
    #allocation8 [shape = 'u8[4096]{0}', space=vmem, size = 0x1000, scoped, tag = 'output window, operand 1, single buffered']
    #allocation9 [shape = 's32[1]{0}', space=sflag, size = 0x4, scoped, tag = 'scoped memory for tpu_custom_call.1']
    %14 = vsyncpa [#allocation3], 0
    %15 = vsyncpa [#allocation6], 0
    %16 = vsyncpa [#allocation4], 0
    %17 = vsyncpa [#allocation9], 0
    // Predicated region
    $region2: #{tpu_custom_call.1} parent=1 // pred_check
      _
    $region3: #{tpu_custom_call.1} parent=1 // pred_check_branch
      %19 = sbr.rel (0) target = $region5
    $region4: #{tpu_custom_call.1} parent=1 // pred_region
      %s21 = ssub.s32 128, 128
      %22 = vsyncadd [#allocation3], %s21
      %s24 = sshll.u32 [#allocation2], 4
      %s25 = int_to_ptr.vmem [resolvable:$true] %s24
      %27 = dma.hbm_to_vmem [thread:$0]  %s0, 128, %s25, [#allocation3]
    $region5: #{tpu_custom_call.1} parent=1 // pred_fallthru
      _
    // Predicated region
    $region6: #{tpu_custom_call.1} parent=1 // pred_check
      _
    $region7: #{tpu_custom_call.1} parent=1 // pred_check_branch
      %29 = sbr.rel (0) target = $region9
    $region8: #{tpu_custom_call.1} parent=1 // pred_region
      _
    $region9: #{tpu_custom_call.1} parent=1 // pred_fallthru
      _
    // Predicated region
    $region10: #{tpu_custom_call.1} parent=1 // pred_check
      _
    $region11: #{tpu_custom_call.1} parent=1 // pred_check_branch
      %31 = sbr.rel (0) target = $region13
    $region12: #{tpu_custom_call.1} parent=1 // pred_region
      _
    $region13: #{tpu_custom_call.1} parent=1 // pred_fallthru
      _
    // Predicated region
    $region14: #{tpu_custom_call.1} parent=1 // pred_check
      _
    $region15: #{tpu_custom_call.1} parent=1 // pred_check_branch
      %33 = sbr.rel (0) target = $region17
    $region16: #{tpu_custom_call.1} parent=1 // pred_region
      _
    $region17: #{tpu_custom_call.1} parent=1 // pred_fallthru
      _
    // Predicated region
    $region18: #{tpu_custom_call.1} parent=1 // pred_check
      _
    $region19: #{tpu_custom_call.1} parent=1 // pred_check_branch
      %35 = sbr.rel (0) target = $region21
    $region20: #{tpu_custom_call.1} parent=1 // pred_region
      %s37 = ssub.s32 512, 512
      %38 = vsyncadd [#allocation6], %s37
      %s39 = sshll.u32 [#allocation5], 4
      %s40 = int_to_ptr.vmem [resolvable:$true] %s39
      %45 = dma.hbm_to_vmem [thread:$0]  %s4, 512, %s40, [#allocation6], 128, 128, 8
    $region21: #{tpu_custom_call.1} parent=1 // pred_fallthru
      _
    // Predicated region
    $region22: #{tpu_custom_call.1} parent=1 // pred_check
      _
    $region23: #{tpu_custom_call.1} parent=1 // pred_check_branch
      %47 = sbr.rel (0) target = $region25
    $region24: #{tpu_custom_call.1} parent=1 // pred_region
      _
    $region25: #{tpu_custom_call.1} parent=1 // pred_fallthru
      _
    // Predicated region
    $region26: #{tpu_custom_call.1} parent=1 // pred_check
      _
    $region27: #{tpu_custom_call.1} parent=1 // pred_check_branch
      %49 = sbr.rel (0) target = $region29
    $region28: #{tpu_custom_call.1} parent=1 // pred_region
      %50 = dma.done [#allocation3], 128
    $region29: #{tpu_custom_call.1} parent=1 // pred_fallthru
      _
    // Predicated region
    $region30: #{tpu_custom_call.1} parent=1 // pred_check
      _
    $region31: #{tpu_custom_call.1} parent=1 // pred_check_branch
      %52 = sbr.rel (0) target = $region33
    $region32: #{tpu_custom_call.1} parent=1 // pred_region
      %53 = dma.done [#allocation6], 512
    $region33: #{tpu_custom_call.1} parent=1 // pred_fallthru
      _
    %v54 = vld [vmem:[#allocation2] sm:$0xff]
    %v55 = vld [vmem:[%s1] sm:$0xff]
    %v56 = vld [vmem:[%s1 + $0x8] sm:$0xff]
    %v57 = vld [vmem:[%s1 + $0x10] sm:$0xff]
    %v58 = vld [vmem:[%s1 + $0x18] sm:$0xff]
    %v59 = vld [vmem:[%s2] sm:$0x1]
    %v61 = vlaneseq
    %v62 = vshrl.u32 %v61, 7
    %v63 = vsub.s32 0, %v62
    %v64 = vrot.slane %v59, %v63
    %vm66 = vcmask 261120
    %v68 = vsel %vm66, %v54, 0
    %70 = vmatprep.subr.mxu0 0.0
    %71 = vmatpush1.msra.mxu0 %v55
    %72 = vmatprep.subr.mxu0 0.0
    %73 = vmatpush1.msra.mxu0 %v56
    %74 = vmatprep.subr.mxu0 0.0
    %75 = vmatpush1.msra.mxu0 %v57
    %76 = vmatprep.subr.mxu0 0.0
    %77 = vmatpush1.msra.mxu0 %v58
    %78 = vmatprep.subr.mxu0 0.0
    %79 = vmatpush1.msra.mxu0 0.0
    %80 = vmatprep.subr.mxu0 0.0
    %81 = vmatpush1.msra.mxu0 0.0
    %82 = vmatprep.subr.mxu0 0.0
    %83 = vmatpush1.msra.mxu0 0.0
    %84 = vmatprep.subr.mxu0 0.0
    %85 = vmatpush1.msra.mxu0 0.0
    %86 = vmatprep.subr.mxu0 0.0
    %87 = vmatpush1.msra.mxu0 0.0
    %88 = vmatprep.subr.mxu0 0.0
    %89 = vmatpush1.msra.mxu0 0.0
    %90 = vmatprep.subr.mxu0 0.0
    %91 = vmatpush1.msra.mxu0 0.0
    %92 = vmatprep.subr.mxu0 0.0
    %93 = vmatpush1.msra.mxu0 0.0
    %94 = vmatprep.subr.mxu0 0.0
    %95 = vmatpush1.msra.mxu0 0.0
    %96 = vmatprep.subr.mxu0 0.0
    %97 = vmatpush1.msra.mxu0 0.0
    %98 = vmatprep.subr.mxu0 0.0
    %99 = vmatpush1.msra.mxu0 0.0
    %100 = vmatprep.subr.mxu0 0.0
    %101 = vmatpush1.msra.mxu0 0.0
    %102 = vmatprep.subr.mxu0 0.0
    %103 = vmatpush1.msra.mxu0 0.0
    %104 = vmatprep.subr.mxu0 0.0
    %105 = vmatpush1.msra.mxu0 0.0
    %106 = vmatprep.subr.mxu0 0.0
    %107 = vmatpush1.msra.mxu0 0.0
    %108 = vmatprep.subr.mxu0 0.0
    %109 = vmatpush1.msra.mxu0 0.0
    %110 = vmatprep.subr.mxu0 0.0
    %111 = vmatpush1.msra.mxu0 0.0
    %112 = vmatprep.subr.mxu0 0.0
    %113 = vmatpush1.msra.mxu0 0.0
    %114 = vmatprep.subr.mxu0 0.0
    %115 = vmatpush1.msra.mxu0 0.0
    %116 = vmatprep.subr.mxu0 0.0
    %117 = vmatpush1.msra.mxu0 0.0
    %118 = vmatprep.subr.mxu0 0.0
    %119 = vmatpush1.msra.mxu0 0.0
    %120 = vmatprep.subr.mxu0 0.0
    %121 = vmatpush1.msra.mxu0 0.0
    %122 = vmatprep.subr.mxu0 0.0
    %123 = vmatpush1.msra.mxu0 0.0
    %124 = vmatprep.subr.mxu0 0.0
    %125 = vmatpush1.msra.mxu0 0.0
    %126 = vmatprep.subr.mxu0 0.0
    %127 = vmatpush1.msra.mxu0 0.0
    %128 = vmatprep.subr.mxu0 0.0
    %129 = vmatpush1.msra.mxu0 0.0
    %130 = vmatprep.subr.mxu0 0.0
    %131 = vmatpush1.msra.mxu0 0.0
    %132 = vmatprep.subr.mxu0 0.0
    %133 = vmatpush1.msra.mxu0 0.0
    %134 = vmatprep.mubr.f32.mxu0 0.0
    %135 = vmatmul.mubr.f32.gmra.mrb[0].mxu0 %v68
    %v136 = vpop.f32.mrb[0].mxu0
    %v137 = vadd.f32 %v64, %v136
    %v138 = vpop.f32.mrb[0].mxu0
    %139 = vdwg.mxu0
    %v140 = vld [vmem:[%s3] sm:$0xff]
    %v141 = vld [vmem:[%s3 + $0x8] sm:$0xff]
    %v142 = vld [vmem:[%s3 + $0x10] sm:$0xff]
    %v143 = vld [vmem:[%s3 + $0x18] sm:$0xff]
    %v145 = vsel %vm66, %v137, 0
    %147 = vmatprep.subr.mxu0 0.0
    %148 = vmatpush1.msra.mxu0 %v140
    %149 = vmatprep.subr.mxu0 0.0
    %150 = vmatpush1.msra.mxu0 %v141
    %151 = vmatprep.subr.mxu0 0.0
    %152 = vmatpush1.msra.mxu0 %v142
    %153 = vmatprep.subr.mxu0 0.0
    %154 = vmatpush1.msra.mxu0 %v143
    %155 = vmatprep.subr.mxu0 0.0
    %156 = vmatpush1.msra.mxu0 0.0
    %157 = vmatprep.subr.mxu0 0.0
    %158 = vmatpush1.msra.mxu0 0.0
    %159 = vmatprep.subr.mxu0 0.0
    %160 = vmatpush1.msra.mxu0 0.0
    %161 = vmatprep.subr.mxu0 0.0
    %162 = vmatpush1.msra.mxu0 0.0
    %163 = vmatprep.subr.mxu0 0.0
    %164 = vmatpush1.msra.mxu0 0.0
    %165 = vmatprep.subr.mxu0 0.0
    %166 = vmatpush1.msra.mxu0 0.0
    %167 = vmatprep.subr.mxu0 0.0
    %168 = vmatpush1.msra.mxu0 0.0
    %169 = vmatprep.subr.mxu0 0.0
    %170 = vmatpush1.msra.mxu0 0.0
    %171 = vmatprep.subr.mxu0 0.0
    %172 = vmatpush1.msra.mxu0 0.0
    %173 = vmatprep.subr.mxu0 0.0
    %174 = vmatpush1.msra.mxu0 0.0
    %175 = vmatprep.subr.mxu0 0.0
    %176 = vmatpush1.msra.mxu0 0.0
    %177 = vmatprep.subr.mxu0 0.0
    %178 = vmatpush1.msra.mxu0 0.0
    %179 = vmatprep.subr.mxu0 0.0
    %180 = vmatpush1.msra.mxu0 0.0
    %181 = vmatprep.subr.mxu0 0.0
    %182 = vmatpush1.msra.mxu0 0.0
    %183 = vmatprep.subr.mxu0 0.0
    %184 = vmatpush1.msra.mxu0 0.0
    %185 = vmatprep.subr.mxu0 0.0
    %186 = vmatpush1.msra.mxu0 0.0
    %187 = vmatprep.subr.mxu0 0.0
    %188 = vmatpush1.msra.mxu0 0.0
    %189 = vmatprep.subr.mxu0 0.0
    %190 = vmatpush1.msra.mxu0 0.0
    %191 = vmatprep.subr.mxu0 0.0
    %192 = vmatpush1.msra.mxu0 0.0
    %193 = vmatprep.subr.mxu0 0.0
    %194 = vmatpush1.msra.mxu0 0.0
    %195 = vmatprep.subr.mxu0 0.0
    %196 = vmatpush1.msra.mxu0 0.0
    %197 = vmatprep.subr.mxu0 0.0
    %198 = vmatpush1.msra.mxu0 0.0
    %199 = vmatprep.subr.mxu0 0.0
    %200 = vmatpush1.msra.mxu0 0.0
    %201 = vmatprep.subr.mxu0 0.0
    %202 = vmatpush1.msra.mxu0 0.0
    %203 = vmatprep.subr.mxu0 0.0
    %204 = vmatpush1.msra.mxu0 0.0
    %205 = vmatprep.subr.mxu0 0.0
    %206 = vmatpush1.msra.mxu0 0.0
    %207 = vmatprep.subr.mxu0 0.0
    %208 = vmatpush1.msra.mxu0 0.0
    %209 = vmatprep.subr.mxu0 0.0
    %210 = vmatpush1.msra.mxu0 0.0
    %211 = vmatprep.mubr.f32.mxu0 0.0
    %212 = vmatmul.mubr.f32.gmra.mrb[0].mxu0 %v145
    %v213 = vpop.f32.mrb[0].mxu0
    %v214 = vadd.f32 0.0, %v213
    %v215 = vpop.f32.mrb[0].mxu0
    %216 = vdwg.mxu0
    %vm217 = vcmask 31744
    %218 = vst.msk [vmem:[%s8] sm:$0xff] %vm217, %v214
    %v219 = vsel %vm217, %v214, -inf
    %220 = vmax.xlane.f32.xlu0 %v219
    %v221 = vpop.xlane.xlu0 %220
    %v222 = vsub.f32 %v214, %v221
    %v223 = vmul.f32 %v222, 1.442695
    %v224 = vpow.pop %v223
    %v225 = vsel %vm217, %v224, 0.0
    %226 = vadd.xlane.f32.xlu0 %v225
    %v227 = vpop.xlane.xlu0 %226
    %v228 = vrcp.pop %v227
    %v229 = vmul.f32 %v224, %v228
    %v230 = vld [vmem:[#allocation5] sm:$0xff]
    %v231 = vld [vmem:[#allocation5 + $0x8] sm:$0xff]
    %v232 = vld [vmem:[#allocation5 + $0x10] sm:$0xff]
    %v233 = vld [vmem:[#allocation5 + $0x18] sm:$0xff]
    %v234 = vld [vmem:[%s5] sm:$0x1]
    %v236 = vlaneseq
    %v237 = vshrl.u32 %v236, 7
    %v238 = vsub.s32 0, %v237
    %v239 = vrot.slane %v234, %v238
    %241 = vmatprep.subr.mxu0 0.0
    %242 = vmatpush1.msra.mxu0 %v230
    %243 = vmatprep.subr.mxu0 0.0
    %244 = vmatpush1.msra.mxu0 %v231
    %245 = vmatprep.subr.mxu0 0.0
    %246 = vmatpush1.msra.mxu0 %v232
    %247 = vmatprep.subr.mxu0 0.0
    %248 = vmatpush1.msra.mxu0 %v233
    %249 = vmatprep.subr.mxu0 0.0
    %250 = vmatpush1.msra.mxu0 0.0
    %251 = vmatprep.subr.mxu0 0.0
    %252 = vmatpush1.msra.mxu0 0.0
    %253 = vmatprep.subr.mxu0 0.0
    %254 = vmatpush1.msra.mxu0 0.0
    %255 = vmatprep.subr.mxu0 0.0
    %256 = vmatpush1.msra.mxu0 0.0
    %257 = vmatprep.subr.mxu0 0.0
    %258 = vmatpush1.msra.mxu0 0.0
    %259 = vmatprep.subr.mxu0 0.0
    %260 = vmatpush1.msra.mxu0 0.0
    %261 = vmatprep.subr.mxu0 0.0
    %262 = vmatpush1.msra.mxu0 0.0
    %263 = vmatprep.subr.mxu0 0.0
    %264 = vmatpush1.msra.mxu0 0.0
    %265 = vmatprep.subr.mxu0 0.0
    %266 = vmatpush1.msra.mxu0 0.0
    %267 = vmatprep.subr.mxu0 0.0
    %268 = vmatpush1.msra.mxu0 0.0
    %269 = vmatprep.subr.mxu0 0.0
    %270 = vmatpush1.msra.mxu0 0.0
    %271 = vmatprep.subr.mxu0 0.0
    %272 = vmatpush1.msra.mxu0 0.0
    %273 = vmatprep.subr.mxu0 0.0
    %274 = vmatpush1.msra.mxu0 0.0
    %275 = vmatprep.subr.mxu0 0.0
    %276 = vmatpush1.msra.mxu0 0.0
    %277 = vmatprep.subr.mxu0 0.0
    %278 = vmatpush1.msra.mxu0 0.0
    %279 = vmatprep.subr.mxu0 0.0
    %280 = vmatpush1.msra.mxu0 0.0
    %281 = vmatprep.subr.mxu0 0.0
    %282 = vmatpush1.msra.mxu0 0.0
    %283 = vmatprep.subr.mxu0 0.0
    %284 = vmatpush1.msra.mxu0 0.0
    %285 = vmatprep.subr.mxu0 0.0
    %286 = vmatpush1.msra.mxu0 0.0
    %287 = vmatprep.subr.mxu0 0.0
    %288 = vmatpush1.msra.mxu0 0.0
    %289 = vmatprep.subr.mxu0 0.0
    %290 = vmatpush1.msra.mxu0 0.0
    %291 = vmatprep.subr.mxu0 0.0
    %292 = vmatpush1.msra.mxu0 0.0
    %293 = vmatprep.subr.mxu0 0.0
    %294 = vmatpush1.msra.mxu0 0.0
    %295 = vmatprep.subr.mxu0 0.0
    %296 = vmatpush1.msra.mxu0 0.0
    %297 = vmatprep.subr.mxu0 0.0
    %298 = vmatpush1.msra.mxu0 0.0
    %299 = vmatprep.subr.mxu0 0.0
    %300 = vmatpush1.msra.mxu0 0.0
    %301 = vmatprep.subr.mxu0 0.0
    %302 = vmatpush1.msra.mxu0 0.0
    %303 = vmatprep.subr.mxu0 0.0
    %304 = vmatpush1.msra.mxu0 0.0
    %305 = vmatprep.mubr.f32.mxu0 0.0
    %306 = vmatmul.mubr.f32.gmra.mrb[0].mxu0 %v145
    %v307 = vpop.f32.mrb[0].mxu0
    %v308 = vadd.f32 %v239, %v307
    %v309 = vpop.f32.mrb[0].mxu0
    %310 = vdwg.mxu0
    %311 = vst.msk [vmem:[#allocation8] sm:$0xff] %vm66, %v308
    %313 = vset.pattern.permute.xlu0 0
    %314 = vperm.xlu0 %313, %v229
    %v315 = vpop.permute.xlu0 %314
    %v317 = vmul.f32 %v315, %v308
    %318 = vset.pattern.permute.xlu0 1
    %319 = vperm.xlu0 %318, %v229
    %v320 = vpop.permute.xlu0 %319
    %v322 = vmul.f32 %v320, %v308
    %324 = vrot.lane.b32.xlu0 %v322, 120
    %v325 = vpop.permute.xlu0 %324
    %v327 = vadd.f32 %v317, %v325
    %328 = vset.pattern.permute.xlu0 2
    %329 = vperm.xlu0 %328, %v229
    %v330 = vpop.permute.xlu0 %329
    %v332 = vmul.f32 %v330, %v308
    %334 = vrot.lane.b32.xlu0 %v332, 112
    %v335 = vpop.permute.xlu0 %334
    %v337 = vadd.f32 %v327, %v335
    %338 = vset.pattern.permute.xlu0 3
    %339 = vperm.xlu0 %338, %v229
    %v340 = vpop.permute.xlu0 %339
    %v342 = vmul.f32 %v340, %v308
    %344 = vrot.lane.b32.xlu0 %v342, 104
    %v345 = vpop.permute.xlu0 %344
    %v347 = vadd.f32 %v337, %v345
    %vm348 = vcmask 64512
    %349 = vst.msk [vmem:[#allocation7] sm:$0xff] %vm348, %v347
    // Predicated region
    $region34: #{tpu_custom_call.1} parent=1 // pred_check
      _
    $region35: #{tpu_custom_call.1} parent=1 // pred_check_branch
      %351 = sbr.rel (0) target = $region37
    $region36: #{tpu_custom_call.1} parent=1 // pred_region
      %s353 = ssub.s32 128, 128
      %354 = vsyncadd [#allocation4], %s353
      %s356 = sshll.u32 [#allocation7], 4
      %s357 = int_to_ptr.vmem [resolvable:$true] %s356
      %359 = dma.vmem_to_hbm [thread:$0]  %s357, 128, %s6, [#allocation4]
    $region37: #{tpu_custom_call.1} parent=1 // pred_fallthru
      _
    // Predicated region
    $region38: #{tpu_custom_call.1} parent=1 // pred_check
      _
    $region39: #{tpu_custom_call.1} parent=1 // pred_check_branch
      %361 = sbr.rel (0) target = $region41
    $region40: #{tpu_custom_call.1} parent=1 // pred_region
      %s363 = ssub.s32 128, 128
      %364 = vsyncadd [#allocation9], %s363
      %s366 = sshll.u32 [#allocation8], 4
      %s367 = int_to_ptr.vmem [resolvable:$true] %s366
      %369 = dma.vmem_to_hbm [thread:$0]  %s367, 128, %s7, [#allocation9]
    $region41: #{tpu_custom_call.1} parent=1 // pred_fallthru
      _
    // Predicated region
    $region42: #{tpu_custom_call.1} parent=1 // pred_check
      _
    $region43: #{tpu_custom_call.1} parent=1 // pred_check_branch
      %371 = sbr.rel (0) target = $region45
    $region44: #{tpu_custom_call.1} parent=1 // pred_region
      _
    $region45: #{tpu_custom_call.1} parent=1 // pred_fallthru
      _
    // Predicated region
    $region46: #{tpu_custom_call.1} parent=1 // pred_check
      _
    $region47: #{tpu_custom_call.1} parent=1 // pred_check_branch
      %373 = sbr.rel (0) target = $region49
    $region48: #{tpu_custom_call.1} parent=1 // pred_region
      %374 = dma.done [#allocation4], 128
    $region49: #{tpu_custom_call.1} parent=1 // pred_fallthru
      _
    // Predicated region
    $region50: #{tpu_custom_call.1} parent=1 // pred_check
      _
    $region51: #{tpu_custom_call.1} parent=1 // pred_check_branch
      %376 = sbr.rel (0) target = $region53
    $region52: #{tpu_custom_call.1} parent=1 // pred_region
      %377 = dma.done [#allocation9], 128
    $region53: #{tpu_custom_call.1} parent=1 // pred_fallthru
      _
    // Predicated region
    $region54: #{tpu_custom_call.1} parent=1 // pred_check
      _
    $region55: #{tpu_custom_call.1} parent=1 // pred_check_branch
      %379 = sbr.rel (0) target = $region57
    $region56: #{tpu_custom_call.1} parent=1 // pred_region
      _
    $region57: #{tpu_custom_call.1} parent=1 // pred_fallthru
      _
    %380 = vsyncpa [#allocation3], 1
    %381 = vsyncpa [#allocation6], 1
    %382 = vsyncpa [#allocation4], 1
    %383 = vsyncpa [#allocation9], 1

</llo_original>
